<compile_context>
chip_gen: v5e
topology: v5e:2x2
jax: 0.10.0
libtpu: 0.0.40
codegen_flags: <defaults>
</compile_context>

<pallas_src>
import jax
import jax.numpy as jnp
from jax.experimental import pallas as pl
from jax.experimental.pallas import tpu as pltpu


def _bap_kernel(feat_ref, rawattn_ref, fm_ref, attn_ref):
    # feat_ref:    (Bb, C, HW)  bf16 features, native channel-major layout
    # rawattn_ref: (Bb, M, HW)  raw attention logits
    # fm_ref:      (Bb, M, C)   L2-normalized pooled features
    # attn_ref:    (Bb, M, HW)  sigmoid(raw_attentions)
    bb = rawattn_ref.shape[0]
    hw = feat_ref.shape[2]
    # F.normalize(pooled, p=2, dim=-1, eps=1e-12) with pooled = S / HW is
    # identical to S / max(||S||, HW * 1e-12); clamp on the squared norm.
    eps_sq = jnp.float32((float(hw) * 1e-12) ** 2)

    def body(i, carry):
        # Sigmoid + normalization in f32 (attention output stays exact).
        a32 = jax.nn.sigmoid(rawattn_ref[i].astype(jnp.float32))        # (M, HW)
        attn_ref[i] = a32.astype(attn_ref.dtype)

        # MXU pool: S[m, c] = sum_hw a[m, hw] * f[c, hw].
        # Contract the last dim of BOTH operands -> no feature transpose
        # anywhere (bf16 operands, f32 accumulation).
        a_bf = a32.astype(jnp.bfloat16)
        s = jax.lax.dot_general(
            a_bf, feat_ref[i],
            dimension_numbers=(((1,), (1,)), ((), ())),
            preferred_element_type=jnp.float32)                          # (M, C)

        nsq = jnp.sum(s * s, axis=-1, keepdims=True)                     # (M, 1)
        inv = jax.lax.rsqrt(jnp.maximum(nsq, eps_sq))                    # EUP slot
        fm_ref[i] = (s * inv).astype(fm_ref.dtype)
        return carry

    # fori_loop bounds live ranges per batch element (unlike a static Python
    # unroll), so large block_b does not cause vreg spills / code blowup.
    jax.lax.fori_loop(0, bb, body, 0, unroll=min(bb, 4))


def _tpu_vmem_capacity_bytes():
    """Per-TensorCore VMEM capacity; conservative fallback if unavailable."""
    try:
        return int(pltpu.get_tpu_info().vmem_capacity_bytes)
    except Exception:
        return 64 << 20  # assume v7x-class worst case


def _choose_block_b(batch, per_b_bytes, vmem_cap):
    """Largest divisor of `batch` whose double-buffered block footprint fits a
    generation-aware budget.  On 2-TC chips (v7x, 64 MiB/TC) prefer an even
    grid so both TensorCores get equal work; on 1-TC chips (v5e/v6e, 128 MiB)
    the grid is a serial loop, so simply maximize the block."""
    two_tc = vmem_cap <= (64 << 20)
    block_budget = (20 << 20) if two_tc else (56 << 20)
    max_by_vmem = max(1, block_budget // max(1, 2 * per_b_bytes))
    target = int(min(batch, max_by_vmem))
    if two_tc and batch >= 2:
        target = min(target, batch // 2)  # keep >= 2 grid steps for the 2 TCs

    best, best_even = 1, None
    for d in range(1, target + 1):
        if batch % d == 0:
            best = d
            if (batch // d) % 2 == 0:
                best_even = d
    if two_tc and best_even is not None:
        return best_even, two_tc
    return best, two_tc


def bap_forward(features, raw_attentions, block_b=None):
    """features: [B, C, H, W], raw_attentions: [B, M, H, W] (NCHW, like PyTorch).

    Returns (feature_matrix [B, M, C], attentions [B, M, H, W]).
    """
    B, C, H, W = features.shape
    _, M, _, _ = raw_attentions.shape
    HW = H * W

    # Native layout, no transpose (free reshape of contiguous NCHW).  bf16 at
    # the boundary halves the dominant HBM read stream; in a real model the
    # cast fuses into the op that produced `features`.
    feat = features.reshape(B, C, HW)
    if feat.dtype != jnp.bfloat16:
        feat = feat.astype(jnp.bfloat16)
    rawa = raw_attentions.reshape(B, M, HW)

    attn_bytes = jnp.dtype(raw_attentions.dtype).itemsize
    fm_bytes = jnp.dtype(features.dtype).itemsize
    per_b_bytes = (HW * C * 2                # bf16 feature block (in)
                   + M * HW * attn_bytes     # raw attention (in)
                   + M * HW * attn_bytes     # attention (out)
                   + M * C * fm_bytes)       # feature matrix (out)

    vmem_cap = _tpu_vmem_capacity_bytes()
    if block_b is None:
        block_b, two_tc = _choose_block_b(B, per_b_bytes, vmem_cap)
    else:
        two_tc = vmem_cap <= (64 << 20)
    assert B % block_b == 0, "block_b must divide the batch dimension"
    grid_b = B // block_b

    # Scoped-VMEM limit: generous on 128-MiB chips (v5e/v6e), capped well
    # below v7x's 64-MiB physical VMEM to leave headroom for internal scratch.
    block_bytes = 2 * block_b * per_b_bytes  # double-buffered in+out blocks
    cap = (52 << 20) if two_tc else (100 << 20)
    vmem_limit = int(min(cap, max(32 << 20, block_bytes + (8 << 20))))

    fm, attn = pl.pallas_call(
        _bap_kernel,
        out_shape=(
            jax.ShapeDtypeStruct((B, M, C), features.dtype),
            jax.ShapeDtypeStruct((B, M, HW), raw_attentions.dtype),
        ),
        grid_spec=pltpu.PrefetchScalarGridSpec(
            num_scalar_prefetch=0,
            grid=(grid_b,),
            in_specs=[
                pl.BlockSpec((block_b, C, HW), lambda b: (b, 0, 0)),
                pl.BlockSpec((block_b, M, HW), lambda b: (b, 0, 0)),
            ],
            out_specs=[
                pl.BlockSpec((block_b, M, C), lambda b: (b, 0, 0)),
                pl.BlockSpec((block_b, M, HW), lambda b: (b, 0, 0)),
            ],
        ),
        compiler_params=pltpu.CompilerParams(
            dimension_semantics=("parallel",),
            vmem_limit_bytes=vmem_limit,
        ),
    )(feat, rawa)

    return fm, attn.reshape(B, M, H, W)


def _bap_reference(features, raw_attentions):
    """Pure-JAX reference mirroring the PyTorch forward (GAP + sigmoid)."""
    B, C, H, W = features.shape
    attn = jax.nn.sigmoid(raw_attentions.astype(jnp.float32))   # [B, M, H, W]
    f = features.astype(jnp.float32)
    pooled = jnp.einsum("bmhw,bchw->bmc", attn, f) / (H * W)
    norm = jnp.maximum(jnp.linalg.norm(pooled, axis=-1, keepdims=True), 1e-12)
    fm = pooled / norm
    return fm.astype(features.dtype), attn.astype(raw_attentions.dtype)


if __name__ == "__main__":
    # Small shapes consistent with the module: B=2 batch, C=32 feature
    # channels, M=8 attention maps, 16x16 spatial.
    B, C, M, H, W = 2, 32, 8, 16, 16
    key = jax.random.PRNGKey(0)
    k1, k2 = jax.random.split(key)
    features = jax.random.normal(k1, (B, C, H, W), dtype=jnp.float32)
    raw_attentions = jax.random.normal(k2, (B, M, H, W), dtype=jnp.float32)

    fm, attn = bap_forward(features, raw_attentions)
    fm = jax.block_until_ready(fm)
    attn = jax.block_until_ready(attn)

    fm_ref, attn_ref = _bap_reference(features, raw_attentions)
    assert fm.shape == (B, M, C) and attn.shape == (B, M, H, W)
    # fm tolerance is relaxed because the MXU matmul uses bf16 operands
    # (f32 accumulation); attentions are computed fully in f32.
    assert jnp.allclose(fm, fm_ref, atol=5e-3, rtol=5e-3)
    assert jnp.allclose(attn, attn_ref, atol=1e-5, rtol=1e-5)

    print("KERNEL_OK")
</pallas_src>

<mosaic_0001>
module attributes {stable_mosaic.version = 11 : i64} {
  func.func @_bap_kernel(%arg0: i32, %arg1: memref<1x32x256xbf16, #tpu.memory_space<vmem>>, %arg2: memref<1x8x256xf32, #tpu.memory_space<vmem>>, %arg3: memref<1x8x32xf32, #tpu.memory_space<vmem>>, %arg4: memref<1x8x256xf32, #tpu.memory_space<vmem>>) attributes {dimension_semantics = [#tpu.dimension_semantics<parallel>], iteration_bounds = array<i64: 2>, scalar_prefetch = 0 : i64, scratch_operands = 0 : i64, tpu.core_type = #tpu.core_type<tc>, window_params = [{transform_indices = @transform_0, window_bounds = array<i64: 1, 32, 256>}, {transform_indices = @transform_1, window_bounds = array<i64: 1, 8, 256>}, {transform_indices = @transform_2, window_bounds = array<i64: 1, 8, 32>}, {transform_indices = @transform_3, window_bounds = array<i64: 1, 8, 256>}]} {
    %cst = arith.constant 6.553600e-20 : f32
    %c0_i32 = arith.constant 0 : i32
    %0 = arith.index_cast %c0_i32 : i32 to index
    %c0 = arith.constant 0 : index
    %c0_0 = arith.constant 0 : index
    %1 = vector.load %arg2[%0, %c0, %c0_0] : memref<1x8x256xf32, #tpu.memory_space<vmem>>, vector<1x8x256xf32>
    %2 = vector.shape_cast %1 : vector<1x8x256xf32> to vector<8x256xf32>
    %3 = arith.negf %2 : vector<8x256xf32>
    %4 = math.exp %3 : vector<8x256xf32>
    %cst_1 = arith.constant 1.000000e+00 : f32
    %5 = vector.broadcast %cst_1 : f32 to vector<8x256xf32>
    %6 = arith.addf %5, %4 : vector<8x256xf32>
    %7 = arith.divf %5, %6 : vector<8x256xf32>
    %8 = arith.index_cast %c0_i32 : i32 to index
    %c0_2 = arith.constant 0 : index
    %c0_3 = arith.constant 0 : index
    %9 = vector.load %arg4[%8, %c0_2, %c0_3] : memref<1x8x256xf32, #tpu.memory_space<vmem>>, vector<1x8x256xf32>
    %10 = vector.shape_cast %9 : vector<1x8x256xf32> to vector<8x256xf32>
    %11 = vector.shape_cast %7 : vector<8x256xf32> to vector<1x8x256xf32>
    tpu.vector_store %arg4[%8, %c0_2, %c0_3], %11 {strides = array<i32>} : memref<1x8x256xf32, #tpu.memory_space<vmem>>, vector<1x8x256xf32>,
    %12 = arith.truncf %7 : vector<8x256xf32> to vector<8x256xbf16>
    %13 = arith.index_cast %c0_i32 : i32 to index
    %c0_4 = arith.constant 0 : index
    %c0_5 = arith.constant 0 : index
    %14 = vector.load %arg1[%13, %c0_4, %c0_5] : memref<1x32x256xbf16, #tpu.memory_space<vmem>>, vector<1x32x256xbf16>
    %15 = vector.shape_cast %14 : vector<1x32x256xbf16> to vector<32x256xbf16>
    %cst_6 = arith.constant dense<0.000000e+00> : vector<8x32xf32>
    %16 = tpu.matmul %12, %15, %cst_6 {dimension_numbers = #tpu.dot_dimension_numbers<[1], [1], [0], [0], [0, 0, 1, 0], [], []>} : vector<8x256xbf16>, vector<32x256xbf16>, vector<8x32xf32> -> vector<8x32xf32>
    %17 = arith.mulf %16, %16 : vector<8x32xf32>
    %cst_7 = arith.constant dense<0.000000e+00> : vector<8xf32>
    %18 = vector.multi_reduction <add>, %17, %cst_7 [1] : vector<8x32xf32> to vector<8xf32>
    %19 = vector.shape_cast %18 : vector<8xf32> to vector<8x1xf32>
    %20 = vector.broadcast %cst : f32 to vector<8x1xf32>
    %21 = arith.maximumf %19, %20 : vector<8x1xf32>
    %22 = math.rsqrt %21 : vector<8x1xf32>
    %23 = vector.broadcast %22 : vector<8x1xf32> to vector<8x32xf32>
    %24 = arith.mulf %16, %23 : vector<8x32xf32>
    %25 = arith.index_cast %c0_i32 : i32 to index
    %c0_8 = arith.constant 0 : index
    %c0_9 = arith.constant 0 : index
    %26 = vector.load %arg3[%25, %c0_8, %c0_9] : memref<1x8x32xf32, #tpu.memory_space<vmem>>, vector<1x8x32xf32>
    %27 = vector.shape_cast %26 : vector<1x8x32xf32> to vector<8x32xf32>
    %28 = vector.shape_cast %24 : vector<8x32xf32> to vector<1x8x32xf32>
    tpu.vector_store %arg3[%25, %c0_8, %c0_9], %28 {strides = array<i32>} : memref<1x8x32xf32, #tpu.memory_space<vmem>>, vector<1x8x32xf32>,
    %c1_i32 = arith.constant 1 : i32
    return
  }
  func.func @transform_0(%arg0: i32) -> (i32, i32, i32) {
    %c0_i32 = arith.constant 0 : i32
    %c0_i32_0 = arith.constant 0 : i32
    %c0_i32_1 = arith.constant 0 : i32
    return %arg0, %c0_i32, %c0_i32_0 : i32, i32, i32
  }
  func.func @transform_1(%arg0: i32) -> (i32, i32, i32) {
    %c0_i32 = arith.constant 0 : i32
    %c0_i32_0 = arith.constant 0 : i32
    %c0_i32_1 = arith.constant 0 : i32
    return %arg0, %c0_i32, %c0_i32_0 : i32, i32, i32
  }
  func.func @transform_2(%arg0: i32) -> (i32, i32, i32) {
    %c0_i32 = arith.constant 0 : i32
    %c0_i32_0 = arith.constant 0 : i32
    %c0_i32_1 = arith.constant 0 : i32
    return %arg0, %c0_i32, %c0_i32_0 : i32, i32, i32
  }
  func.func @transform_3(%arg0: i32) -> (i32, i32, i32) {
    %c0_i32 = arith.constant 0 : i32
    %c0_i32_0 = arith.constant 0 : i32
    %c0_i32_1 = arith.constant 0 : i32
    return %arg0, %c0_i32, %c0_i32_0 : i32, i32, i32
  }
}

</mosaic_0001>

<llo_original>
// kernel: tpu_custom_call.1
$region0: #{tpu_custom_call.1}
  #allocation0 [shape = 'u32[]', space=smem, size = 0x4, offset = 0x4, fixed_abs, tag = 'smem constant byte address 0x4 - core index']
  #allocation1 [shape = 'u32[72,128]{1,0:T(1,128)}', space=vmem, size = 0x9000, scoped, tag = 'internal scratch']
  %s0 = inlined_call_operand.hbm [shape: bf16[2,32,256], index: 0, kind: input, shape index: {}]
  %s1 = inlined_call_operand.hbm [shape: f32[2,8,256], index: 1, kind: input, shape index: {}]
  %s2 = inlined_call_operand.hbm [shape: f32[2,8,32], index: 2, kind: output, shape index: {0}]
  %s3 = inlined_call_operand.hbm [shape: f32[2,8,256], index: 3, kind: output, shape index: {1}]
  %4 = xla_tuple %s2, %s3
  %s5 = sld [smem:[#allocation0]]
  $region57: #{tpu_custom_call.1} parent=0
    _
  %s7 = ssub.s32 1, %s5
  %s8 = scalar_select 0, %s7, %s5
  $region1: #{tpu_custom_call.1} parent=0
    #allocation2 [shape = 'u8[32768]{0}', space=vmem, size = 0x8000, scoped, tag = 'input window, operand 0']
    #allocation3 [shape = 's32[2]{0}', space=sflag, size = 0x8, scoped, tag = 'scoped memory for tpu_custom_call.1']
    #allocation4 [shape = 's32[2]{0}', space=sflag, size = 0x8, scoped, tag = 'scoped memory for tpu_custom_call.1']
    #allocation5 [shape = 'u8[16384]{0}', space=vmem, size = 0x4000, scoped, tag = 'input window, operand 1']
    #allocation6 [shape = 's32[2]{0}', space=sflag, size = 0x8, scoped, tag = 'scoped memory for tpu_custom_call.1']
    #allocation7 [shape = 'u8[8192]{0}', space=vmem, size = 0x2000, scoped, tag = 'output window, operand 0']
    #allocation8 [shape = 'u8[16384]{0}', space=vmem, size = 0x4000, scoped, tag = 'output window, operand 1']
    #allocation9 [shape = 's32[2]{0}', space=sflag, size = 0x8, scoped, tag = 'scoped memory for tpu_custom_call.1']
    %9 = vsyncpa [#allocation3], 0
    %s10 = scalar_lea.sflag [#allocation3], 1
    %11 = vsyncpa %s10, 0
    %12 = vsyncpa [#allocation6], 0
    %s13 = scalar_lea.sflag [#allocation6], 1
    %14 = vsyncpa %s13, 0
    %15 = vsyncpa [#allocation4], 0
    %s16 = scalar_lea.sflag [#allocation4], 1
    %17 = vsyncpa %s16, 0
    %18 = vsyncpa [#allocation9], 0
    %s19 = scalar_lea.sflag [#allocation9], 1
    %20 = vsyncpa %s19, 0
    loop: start=0, step=1, limit=4
    $region2: #{tpu_custom_call.1} parent=1 // loop_pre_header
      _
    $region3: #{tpu_custom_call.1} parent=1 // loop_header
      %s22 = sphi 0, %s26
      %p23 = scmp.ge.s32.totalorder %s22, 4
      %s32 = sphi 0, %s34
      %s35 = sphi 0, %s32
      %s36 = sphi 0, %s35
      %s52 = sphi 0, %s36
      %s58 = sphi 0, %s60
      %s61 = sphi 0, %s58
      %s62 = sphi 0, %s61
      %s78 = sphi 0, %s62
      %s84 = sphi 0, %s86
      %s87 = sphi 0, %s84
      %s88 = sphi 0, %s87
      %s104 = sphi 0, %s88
      %s110 = sphi 0, %s112
      %s113 = sphi 0, %s110
      %s114 = sphi 0, %s113
      %s130 = sphi 0, %s114
    $region4: #{tpu_custom_call.1} parent=1 // loop_header_branch
      %25 = sbr.rel (%p23) target = $region8
    $region5: #{tpu_custom_call.1} parent=1 // loop_body
      %s27 = ssub.s32 %s22, 1
      %s28 = ssub.s32 %s22, 2
      %s29 = sadd.s32 %s22, 1
      %s30 = ssub.s32 %s22, %s29
      %p31 = scmp.eq.s32.totalorder %s30, 0
      %s33 = sadd.s32 %s32, 1
      %s34 = scalar_select %p31, %s32, %s33
      %p37 = pneg %p31
      %p38 = scmp.eq.s32.totalorder %s22, 1
      %p39 = por %p37, %p38
      %p40 = scmp.ne.s32.totalorder %s32, %s35
      %p41 = scmp.eq.s32.totalorder %s22, 0
      %p42 = por %p40, %p41
      %p43 = scmp.ne.s32.totalorder %s32, %s35
      %p44 = scmp.eq.s32.totalorder %s27, 1
      %p45 = por %p43, %p44
      %p46 = scmp.ne.s32.totalorder %s35, %s36
      %p47 = scmp.eq.s32.totalorder %s27, 0
      %p48 = por %p46, %p47
      %p49 = scmp.ne.s32.totalorder %s35, %s36
      %p50 = scmp.eq.s32.totalorder %s28, 1
      %p51 = por %p49, %p50
      %p53 = scmp.ne.s32.totalorder %s36, %s52
      %p54 = scmp.eq.s32.totalorder %s28, 0
      %p55 = por %p53, %p54
      %s56 = ssub.s32 %s22, %s29
      %p57 = scmp.eq.s32.totalorder %s56, 0
      %s59 = sadd.s32 %s58, 1
      %s60 = scalar_select %p57, %s58, %s59
      %p63 = pneg %p57
      %p64 = scmp.eq.s32.totalorder %s22, 1
      %p65 = por %p63, %p64
      %p66 = scmp.ne.s32.totalorder %s58, %s61
      %p67 = scmp.eq.s32.totalorder %s22, 0
      %p68 = por %p66, %p67
      %p69 = scmp.ne.s32.totalorder %s58, %s61
      %p70 = scmp.eq.s32.totalorder %s27, 1
      %p71 = por %p69, %p70
      %p72 = scmp.ne.s32.totalorder %s61, %s62
      %p73 = scmp.eq.s32.totalorder %s27, 0
      %p74 = por %p72, %p73
      %p75 = scmp.ne.s32.totalorder %s61, %s62
      %p76 = scmp.eq.s32.totalorder %s28, 1
      %p77 = por %p75, %p76
      %p79 = scmp.ne.s32.totalorder %s62, %s78
      %p80 = scmp.eq.s32.totalorder %s28, 0
      %p81 = por %p79, %p80
      %s82 = ssub.s32 %s22, %s29
      %p83 = scmp.eq.s32.totalorder %s82, 0
      %s85 = sadd.s32 %s84, 1
      %s86 = scalar_select %p83, %s84, %s85
      %p89 = pneg %p83
      %p90 = scmp.eq.s32.totalorder %s22, 1
      %p91 = por %p89, %p90
      %p92 = scmp.ne.s32.totalorder %s84, %s87
      %p93 = scmp.eq.s32.totalorder %s22, 0
      %p94 = por %p92, %p93
      %p95 = scmp.ne.s32.totalorder %s84, %s87
      %p96 = scmp.eq.s32.totalorder %s27, 1
      %p97 = por %p95, %p96
      %p98 = scmp.ne.s32.totalorder %s87, %s88
      %p99 = scmp.eq.s32.totalorder %s27, 0
      %p100 = por %p98, %p99
      %p101 = scmp.ne.s32.totalorder %s87, %s88
      %p102 = scmp.eq.s32.totalorder %s28, 1
      %p103 = por %p101, %p102
      %p105 = scmp.ne.s32.totalorder %s88, %s104
      %p106 = scmp.eq.s32.totalorder %s28, 0
      %p107 = por %p105, %p106
      %s108 = ssub.s32 %s22, %s29
      %p109 = scmp.eq.s32.totalorder %s108, 0
      %s111 = sadd.s32 %s110, 1
      %s112 = scalar_select %p109, %s110, %s111
      %p115 = pneg %p109
      %p116 = scmp.eq.s32.totalorder %s22, 1
      %p117 = por %p115, %p116
      %p118 = scmp.ne.s32.totalorder %s110, %s113
      %p119 = scmp.eq.s32.totalorder %s22, 0
      %p120 = por %p118, %p119
      %p121 = scmp.ne.s32.totalorder %s110, %s113
      %p122 = scmp.eq.s32.totalorder %s27, 1
      %p123 = por %p121, %p122
      %p124 = scmp.ne.s32.totalorder %s113, %s114
      %p125 = scmp.eq.s32.totalorder %s27, 0
      %p126 = por %p124, %p125
      %p127 = scmp.ne.s32.totalorder %s113, %s114
      %p128 = scmp.eq.s32.totalorder %s28, 1
      %p129 = por %p127, %p128
      %p131 = scmp.ne.s32.totalorder %s114, %s130
      %p132 = scmp.eq.s32.totalorder %s28, 0
      %p133 = por %p131, %p132
      %p134 = scmp.le.s32.totalorder 1, %s22
      %p135 = scmp.lt.s32.totalorder %s22, 3
      %p136 = pnand %p134, %p135
      %p137 = pneg %p136
      // Predicated region
      $region9: #{tpu_custom_call.1} parent=5 // pred_check
        _
      $region10: #{tpu_custom_call.1} parent=5 // pred_check_branch
        %139 = sbr.rel (%p136) target = $region12
      $region11: #{tpu_custom_call.1} parent=5 // pred_region
        %s140 = ssub.s32 %s22, 1
      $region12: #{tpu_custom_call.1} parent=5 // pred_fallthru
        _
      %p141 = scmp.lt.s32.totalorder %s22, 2
      // Predicated region
      $region13: #{tpu_custom_call.1} parent=5 // pred_check
        %p142 = pneg %p141
      $region14: #{tpu_custom_call.1} parent=5 // pred_check_branch
        %144 = sbr.rel (%p142) target = $region16
      $region15: #{tpu_custom_call.1} parent=5 // pred_region
        // Predicated region
        $region17: #{tpu_custom_call.1} parent=15 // pred_check
          %p145 = pneg %p42
        $region18: #{tpu_custom_call.1} parent=15 // pred_check_branch
          %147 = sbr.rel (%p145) target = $region20
        $region19: #{tpu_custom_call.1} parent=15 // pred_region
          %s148 = sand.u32 %s32, 1
          %s149 = scalar_lea.sflag [#allocation3], %s148
          %s150 = sand.u32 %s32, 1
          %s151 = smul.addr %s150, 32
          %s152 = scalar_lea.vmem [#allocation2], %s151
          %154 = vsyncadd %s149, 0
          %s155 = smul.addr %s22, 8
          %s156 = smul.addr %s155, 4
          %s157 = scalar_lea.hbm %s0, %s156
          %s158 = sshll.u32 %s157, 4
          %s159 = int_to_ptr.hbm [resolvable:$true] %s158
          %s160 = sshll.u32 %s152, 4
          %s161 = int_to_ptr.vmem [resolvable:$true] %s160
          %166 = dma.hbm_to_vmem [thread:$0]  %s159, 512, %s161, %s149, 128, 128, 8
        $region20: #{tpu_custom_call.1} parent=15 // pred_fallthru
          _
        // Predicated region
        $region21: #{tpu_custom_call.1} parent=15 // pred_check
          %p167 = pneg %p68
        $region22: #{tpu_custom_call.1} parent=15 // pred_check_branch
          %169 = sbr.rel (%p167) target = $region24
        $region23: #{tpu_custom_call.1} parent=15 // pred_region
          %s170 = sand.u32 %s58, 1
          %s171 = scalar_lea.sflag [#allocation6], %s170
          %s172 = sand.u32 %s58, 1
          %s173 = smul.addr %s172, 16
          %s174 = scalar_lea.vmem [#allocation5], %s173
          %176 = vsyncadd %s171, 0
          %s177 = smul.addr %s22, 2
          %s178 = smul.addr %s177, 8
          %s179 = scalar_lea.hbm %s1, %s178
          %s181 = sshll.u32 %s179, 4
          %s182 = int_to_ptr.hbm [resolvable:$true] %s181
          %s183 = sshll.u32 %s174, 4
          %s184 = int_to_ptr.vmem [resolvable:$true] %s183
          %186 = dma.hbm_to_vmem [thread:$0]  %s182, 256, %s184, %s171
        $region24: #{tpu_custom_call.1} parent=15 // pred_fallthru
          _
      $region16: #{tpu_custom_call.1} parent=5 // pred_fallthru
        _
      %p187 = scmp.le.s32.totalorder 1, %s22
      %p188 = scmp.lt.s32.totalorder %s22, 3
      %p189 = pnand %p187, %p188
      %p190 = pneg %p189
      // Predicated region
      $region25: #{tpu_custom_call.1} parent=5 // pred_check
        _
      $region26: #{tpu_custom_call.1} parent=5 // pred_check_branch
        %192 = sbr.rel (%p189) target = $region28
      $region27: #{tpu_custom_call.1} parent=5 // pred_region
        %s193 = ssub.s32 %s22, 1
        %s194 = sand.u32 %s35, 1
        %s195 = scalar_lea.sflag [#allocation3], %s194
        %s196 = sand.u32 %s35, 1
        %s197 = smul.addr %s196, 32
        %s198 = scalar_lea.vmem [#allocation2], %s197
        // Predicated region
        $region29: #{tpu_custom_call.1} parent=27 // pred_check
          %p199 = pneg %p48
        $region30: #{tpu_custom_call.1} parent=27 // pred_check_branch
          %201 = sbr.rel (%p199) target = $region32
        $region31: #{tpu_custom_call.1} parent=27 // pred_region
          %203 = dma.done %s195, 512
        $region32: #{tpu_custom_call.1} parent=27 // pred_fallthru
          _
        %s204 = sand.u32 %s61, 1
        %s205 = scalar_lea.sflag [#allocation6], %s204
        %s206 = sand.u32 %s61, 1
        %s207 = smul.addr %s206, 16
        %s208 = scalar_lea.vmem [#allocation5], %s207
        // Predicated region
        $region33: #{tpu_custom_call.1} parent=27 // pred_check
          %p209 = pneg %p74
        $region34: #{tpu_custom_call.1} parent=27 // pred_check_branch
          %211 = sbr.rel (%p209) target = $region36
        $region35: #{tpu_custom_call.1} parent=27 // pred_region
          %213 = dma.done %s205, 256
        $region36: #{tpu_custom_call.1} parent=27 // pred_fallthru
          _
        %s214 = sand.u32 %s35, 1
        %s215 = scalar_lea.sflag [#allocation3], %s214
        %s216 = sand.u32 %s35, 1
        %s217 = smul.addr %s216, 32
        %s218 = scalar_lea.vmem [#allocation2], %s217
        %p219 = pneg %p48
        %p220 = pneg %p45
        %s221 = sand.u32 %s61, 1
        %s222 = scalar_lea.sflag [#allocation6], %s221
        %s223 = sand.u32 %s61, 1
        %s224 = smul.addr %s223, 16
        %s225 = scalar_lea.vmem [#allocation5], %s224
        %p226 = pneg %p74
        %p227 = pneg %p71
        %p228 = pneg %p100
        %p229 = pneg %p97
        %s230 = sand.u32 %s87, 1
        %s231 = scalar_lea.sflag [#allocation4], %s230
        %s232 = sand.u32 %s87, 1
        %s233 = smul.addr %s232, 8
        %s234 = scalar_lea.vmem [#allocation7], %s233
        %p235 = pneg %p126
        %p236 = pneg %p123
        %s237 = sand.u32 %s113, 1
        %s238 = scalar_lea.sflag [#allocation9], %s237
        %s239 = sand.u32 %s113, 1
        %s240 = smul.addr %s239, 16
        %s241 = scalar_lea.vmem [#allocation8], %s240
        %v243 = vld [vmem:[%s208] sm:$0xff]
        %v244 = vld [vmem:[%s208 + $0x8] sm:$0xff]
        %v245 = vxor.u32 %v243, 2147483648
        %v246 = vxor.u32 %v244, 2147483648
        %v247 = vmul.f32 %v245, 1.442695
        %v248 = vpow.pop %v247
        %v249 = vmul.f32 %v246, 1.442695
        %v250 = vpow.pop %v249
        %v251 = vadd.f32 %v248, 1.0
        %v252 = vadd.f32 %v250, 1.0
        %v253 = vrcp.pop %v251
        %v254 = vmul.f32 %v251, %v253
        %v255 = vsub.f32 1.0, %v254
        %v256 = vmul.f32 %v253, %v255
        %v257 = vadd.f32 %v253, %v256
        %vm258 = vweird.f32 %v251
        %vm259 = vweird.f32 %v253
        %vm260 = vmor %vm258, %vm259
        %v261 = vsel %vm260, %v253, %v257
        %v262 = vand.u32 2147483647, %v251
        %vm263 = vcmp.eq.f32.partialorder %v262, 8.507059e+37
        %v264 = vand.u32 %v251, 2147483648
        %v265 = vor.u32 1.1754944e-38, %v264
        %v266 = vsel %vm263, %v265, %v261
        %v267 = vmul.f32 1.0, %v266
        %v268 = vrcp.pop %v252
        %v269 = vmul.f32 %v252, %v268
        %v270 = vsub.f32 1.0, %v269
        %v271 = vmul.f32 %v268, %v270
        %v272 = vadd.f32 %v268, %v271
        %vm273 = vweird.f32 %v252
        %vm274 = vweird.f32 %v268
        %vm275 = vmor %vm273, %vm274
        %v276 = vsel %vm275, %v268, %v272
        %v277 = vand.u32 2147483647, %v252
        %vm278 = vcmp.eq.f32.partialorder %v277, 8.507059e+37
        %v279 = vand.u32 %v252, 2147483648
        %v280 = vor.u32 1.1754944e-38, %v279
        %v281 = vsel %vm278, %v280, %v276
        %v282 = vmul.f32 1.0, %v281
        %283 = vst [vmem:[%s241] sm:$0xff] %v267
        %284 = vst [vmem:[%s241 + $0x8] sm:$0xff] %v282
        %v285 = vpack.c.bf16 %v267, %v267
        %v286 = vpack.c.bf16 %v282, %v282
        %v287 = vld [vmem:[%s198] sm:$0xff]
        %v288 = vld [vmem:[%s198 + $0x8] sm:$0xff]
        %v289 = vld [vmem:[%s198 + $0x10] sm:$0xff]
        %v290 = vld [vmem:[%s198 + $0x18] sm:$0xff]
        %v295 = vunpack.c.l.b16 %v287
        %v296 = vunpack.c.h.b16 %v287
        %v297 = vunpack.c.l.b16 %v288
        %v298 = vunpack.c.h.b16 %v288
        %v299 = vunpack.c.l.b16 %v289
        %v300 = vunpack.c.h.b16 %v289
        %v301 = vunpack.c.l.b16 %v290
        %v302 = vunpack.c.h.b16 %v290
        %v303 = vpack.c.b16 %v297, %v295
        %v304 = vpack.c.b16 %v298, %v296
        %v305 = vpack.c.b16 %v301, %v299
        %v306 = vpack.c.b16 %v302, %v300
        %311 = vmatpush.bf16.xpose.msra.mxu0 0
        %312 = vmatpush.bf16.xpose.msra.mxu0 0
        %313 = vmatpush.bf16.xpose.msra.mxu0 0
        %314 = vmatpush.bf16.xpose.msra.mxu0 0
        %315 = vmatpush.bf16.xpose.msra.mxu0 0
        %316 = vmatpush.bf16.xpose.msra.mxu0 0
        %317 = vmatpush.bf16.xpose.msra.mxu0 %v305
        %318 = vmatpush.bf16.xpose.msra.mxu0 %v303
        %319 = vmatmul.bf16.gmra.mxu0 %v285
        %v320 = vpop.f32.mrf.mxu0
        %v321 = vadd.f32 0.0, %v320
        %v322 = vpop.f32.mrf.mxu0
        %323 = vdwg.mxu0
        %324 = vmatpush.bf16.xpose.msra.mxu0 0
        %325 = vmatpush.bf16.xpose.msra.mxu0 0
        %326 = vmatpush.bf16.xpose.msra.mxu0 0
        %327 = vmatpush.bf16.xpose.msra.mxu0 0
        %328 = vmatpush.bf16.xpose.msra.mxu0 0
        %329 = vmatpush.bf16.xpose.msra.mxu0 0
        %330 = vmatpush.bf16.xpose.msra.mxu0 %v306
        %331 = vmatpush.bf16.xpose.msra.mxu0 %v304
        %332 = vmatmul.bf16.gmra.mxu0 %v286
        %v333 = vpop.f32.mrf.mxu0
        %v334 = vadd.f32 %v321, %v333
        %v335 = vpop.f32.mrf.mxu0
        %336 = vdwg.mxu0
        %v337 = vmul.f32 %v334, %v334
        %vm338 = vcmask 261120
        %v339 = vsel %vm338, %v337, 0.0
        %340 = vadd.xlane.f32.xlu0 %v339
        %v341 = vpop.xlane.xlu0 %340
        %v342 = vmax.f32 %v341, 6.5536e-20
        %v343 = vrsqrt.pop %v342
        %v344 = vmul.f32 %v343, %v342
        %v345 = vmul.f32 %v344, %v343
        %v346 = vmul.f32 0.5, %v345
        %v347 = vsub.f32 1.5, %v346
        %v348 = vmul.f32 %v343, %v347
        %vm349 = vweird.f32 %v342
        %vm350 = vweird.f32 %v343
        %vm351 = vmor %vm349, %vm350
        %v352 = vsel %vm351, %v343, %v348
        %v353 = vmul.f32 %v334, %v352
        %354 = vst.msk [vmem:[%s234] sm:$0xff] %vm338, %v353
        %s355 = sand.u32 %s87, 1
        %s356 = scalar_lea.sflag [#allocation4], %s355
        %s357 = sand.u32 %s87, 1
        %s358 = smul.addr %s357, 8
        %s359 = scalar_lea.vmem [#allocation7], %s358
        %s360 = sand.u32 %s113, 1
        %s361 = scalar_lea.sflag [#allocation9], %s360
        %s362 = sand.u32 %s113, 1
        %s363 = smul.addr %s362, 16
        %s364 = scalar_lea.vmem [#allocation8], %s363
        // Predicated region
        $region37: #{tpu_custom_call.1} parent=27 // pred_check
          %p365 = pneg %p97
        $region38: #{tpu_custom_call.1} parent=27 // pred_check_branch
          %367 = sbr.rel (%p365) target = $region40
        $region39: #{tpu_custom_call.1} parent=27 // pred_region
          %369 = vsyncadd %s356, 0
          %s370 = smul.addr %s27, 8
          %s371 = scalar_lea.hbm %s2, %s370
          %s373 = sshll.u32 %s359, 4
          %s374 = int_to_ptr.vmem [resolvable:$true] %s373
          %s375 = sshll.u32 %s371, 4
          %s376 = int_to_ptr.hbm [resolvable:$true] %s375
          %378 = dma.vmem_to_hbm [thread:$0]  %s374, 128, %s376, %s356
        $region40: #{tpu_custom_call.1} parent=27 // pred_fallthru
          _
        // Predicated region
        $region41: #{tpu_custom_call.1} parent=27 // pred_check
          %p379 = pneg %p123
        $region42: #{tpu_custom_call.1} parent=27 // pred_check_branch
          %381 = sbr.rel (%p379) target = $region44
        $region43: #{tpu_custom_call.1} parent=27 // pred_region
          %383 = vsyncadd %s361, 0
          %s384 = smul.addr %s27, 2
          %s385 = smul.addr %s384, 8
          %s386 = scalar_lea.hbm %s3, %s385
          %s388 = sshll.u32 %s364, 4
          %s389 = int_to_ptr.vmem [resolvable:$true] %s388
          %s390 = sshll.u32 %s386, 4
          %s391 = int_to_ptr.hbm [resolvable:$true] %s390
          %393 = dma.vmem_to_hbm [thread:$0]  %s389, 256, %s391, %s361
        $region44: #{tpu_custom_call.1} parent=27 // pred_fallthru
          _
      $region28: #{tpu_custom_call.1} parent=5 // pred_fallthru
        _
      %p394 = scmp.le.s32.totalorder 2, %s22
      // Predicated region
      $region45: #{tpu_custom_call.1} parent=5 // pred_check
        %p395 = pneg %p394
      $region46: #{tpu_custom_call.1} parent=5 // pred_check_branch
        %397 = sbr.rel (%p395) target = $region48
      $region47: #{tpu_custom_call.1} parent=5 // pred_region
        %s398 = ssub.s32 %s22, 2
        // Predicated region
        $region49: #{tpu_custom_call.1} parent=47 // pred_check
          %p399 = pneg %p103
        $region50: #{tpu_custom_call.1} parent=47 // pred_check_branch
          %401 = sbr.rel (%p399) target = $region52
        $region51: #{tpu_custom_call.1} parent=47 // pred_region
          %s402 = sand.u32 %s88, 1
          %s403 = scalar_lea.sflag [#allocation4], %s402
          %s404 = sand.u32 %s88, 1
          %s405 = smul.addr %s404, 8
          %s406 = scalar_lea.vmem [#allocation7], %s405
          %408 = dma.done %s403, 128
        $region52: #{tpu_custom_call.1} parent=47 // pred_fallthru
          _
        // Predicated region
        $region53: #{tpu_custom_call.1} parent=47 // pred_check
          %p409 = pneg %p129
        $region54: #{tpu_custom_call.1} parent=47 // pred_check_branch
          %411 = sbr.rel (%p409) target = $region56
        $region55: #{tpu_custom_call.1} parent=47 // pred_region
          %s412 = sand.u32 %s114, 1
          %s413 = scalar_lea.sflag [#allocation9], %s412
          %s414 = sand.u32 %s114, 1
          %s415 = smul.addr %s414, 16
          %s416 = scalar_lea.vmem [#allocation8], %s415
          %418 = dma.done %s413, 256
        $region56: #{tpu_custom_call.1} parent=47 // pred_fallthru
          _
      $region48: #{tpu_custom_call.1} parent=5 // pred_fallthru
        _
    $region6: #{tpu_custom_call.1} parent=1 // loop_footer
      %s26 = sadd.s32 1, %s22
    $region7: #{tpu_custom_call.1} parent=1 // loop_footer_branch
      %21 = sbr.rel target = $region3
    $region8: #{tpu_custom_call.1} parent=1 // loop_exit
      _
    %419 = vsyncpa [#allocation3], 1
    %s420 = scalar_lea.sflag [#allocation3], 1
    %421 = vsyncpa %s420, 1
    %422 = vsyncpa [#allocation6], 1
    %s423 = scalar_lea.sflag [#allocation6], 1
    %424 = vsyncpa %s423, 1
    %425 = vsyncpa [#allocation4], 1
    %s426 = scalar_lea.sflag [#allocation4], 1
    %427 = vsyncpa %s426, 1
    %428 = vsyncpa [#allocation9], 1
    %s429 = scalar_lea.sflag [#allocation9], 1
    %430 = vsyncpa %s429, 1

</llo_original>
